<compile_context>
chip_gen: v6e
topology: v6e:2x2x1
jax: 0.10.0
libtpu: 0.0.40
codegen_flags: <defaults>
</compile_context>

<pallas_src>
import functools

import jax
import jax.numpy as jnp
from jax import lax
from jax.experimental import pallas as pl
from jax.experimental.pallas import tpu as pltpu

_LANES = 128
_ACC_ROWS = 8                 # per-partial accumulator slab is one (8,128) vreg
_MAX_TILE_ROWS = 1024         # 1024 sublane-rows * 128 lanes = 131072 boxes per grid step
_EPS = 1e-7


# ----------------------------------------------------------------------------
# Pallas kernels (tiled, accumulated reductions; mask computed in-kernel)
# ----------------------------------------------------------------------------
def _valid_mask(n_ref, tile_rows):
    """Validity mask [tile_rows, 128] for the current grid block, from the SMEM count."""
    block = pl.program_id(0) * pl.num_programs(1) + pl.program_id(1)
    row0 = block * tile_rows
    rows = lax.broadcasted_iota(jnp.int32, (tile_rows, _LANES), 0)
    lanes = lax.broadcasted_iota(jnp.int32, (tile_rows, _LANES), 1)
    idx = (row0 + rows) * _LANES + lanes
    return idx < n_ref[0]


def _accumulate(out_ref, loss, tile_rows):
    """Fold a [tile_rows,128] contribution into the resident [1,8,128] output block."""
    folded = loss.reshape(tile_rows // _ACC_ROWS, _ACC_ROWS, _LANES).sum(axis=0)
    out_ref[...] += folded.reshape(1, _ACC_ROWS, _LANES)


def _giou_sum_kernel(n_ref, pred_ref, tgt_ref, out_ref):
    """GIoU loss (1 - GIoU) summed over valid predictions.

    n_ref:             SMEM scalar-prefetch (1,) int32 valid-box count.
    pred_ref, tgt_ref: [4, tile_rows, 128] xyxy boxes (coord-major, fully (8,128)-packed).
    out_ref:           [1, 8, 128] per-partial accumulator block (resident across steps).
    """
    i = pl.program_id(1)

    @pl.when(i == 0)
    def _init():
        out_ref[...] = jnp.zeros_like(out_ref)

    px1 = pred_ref[0]
    py1 = pred_ref[1]
    px2 = pred_ref[2]
    py2 = pred_ref[3]

    tx1 = tgt_ref[0]
    ty1 = tgt_ref[1]
    tx2 = tgt_ref[2]
    ty2 = tgt_ref[3]

    p_area = (px2 - px1) * (py2 - py1)
    t_area = (tx2 - tx1) * (ty2 - ty1)

    # intersection
    iw = jnp.maximum(jnp.minimum(px2, tx2) - jnp.maximum(px1, tx1), 0.0)
    ih = jnp.maximum(jnp.minimum(py2, ty2) - jnp.maximum(py1, ty1), 0.0)
    inter = iw * ih

    union = p_area + t_area - inter
    iou = inter / (union + _EPS)          # exact f32 divide: HBM-bound kernel, VPU/EUP slack

    # smallest enclosing box
    ew = jnp.maximum(px2, tx2) - jnp.minimum(px1, tx1)
    eh = jnp.maximum(py2, ty2) - jnp.minimum(py1, ty1)
    e_area = ew * eh

    giou = iou - (e_area - union) / (e_area + _EPS)

    tile_rows = px1.shape[0]
    loss = jnp.where(_valid_mask(n_ref, tile_rows), 1.0 - giou, 0.0)
    _accumulate(out_ref, loss, tile_rows)


def _l1_sum_kernel(n_ref, pred_ref, tgt_ref, out_ref):
    """L1 regression loss summed over valid predictions (and all 4 coords)."""
    i = pl.program_id(1)

    @pl.when(i == 0)
    def _init():
        out_ref[...] = jnp.zeros_like(out_ref)

    d = (jnp.abs(pred_ref[0] - tgt_ref[0])
         + jnp.abs(pred_ref[1] - tgt_ref[1])
         + jnp.abs(pred_ref[2] - tgt_ref[2])
         + jnp.abs(pred_ref[3] - tgt_ref[3]))

    tile_rows = d.shape[0]
    loss = jnp.where(_valid_mask(n_ref, tile_rows), d, 0.0)
    _accumulate(out_ref, loss, tile_rows)


# ----------------------------------------------------------------------------
# Wrapper: layout plan, packing, pallas_call
# ----------------------------------------------------------------------------
def _ceil_to(x, m):
    return -(-x // m) * m


def _plan(n, max_tile_rows):
    """Returns (tile_rows, num_partials, steps_per_partial, rows_pad)."""
    rows = max(1, -(-n // _LANES))
    rows8 = _ceil_to(rows, _ACC_ROWS)
    tile_rows = min(max_tile_rows, rows8)
    steps = -(-rows8 // tile_rows)
    if steps > 1:
        # Even number of blocks -> leading "parallel" axis of 2 (both TCs on v7x).
        steps = _ceil_to(steps, 2)
        num_partials = 2
    else:
        num_partials = 1
    steps_per_partial = steps // num_partials
    rows_pad = steps * tile_rows
    return tile_rows, num_partials, steps_per_partial, rows_pad


@functools.partial(
    jax.jit,
    static_argnames=("kernel", "tile_rows", "num_partials", "steps_per_partial",
                     "rows_pad", "flops_per_elem", "transcendentals_per_elem"))
def _box_loss_sum(pred_n4, tgt_n4, n_arr, *, kernel, tile_rows, num_partials,
                  steps_per_partial, rows_pad, flops_per_elem, transcendentals_per_elem):
    def pack(a):
        # [N, 4] -> [4, rows_pad, 128] coord-major, fully (8,128)-packed (single fused copy).
        n = a.shape[0]
        n_pad = rows_pad * _LANES
        a = jnp.transpose(a.astype(jnp.float32))          # [4, N]
        a = jnp.pad(a, ((0, 0), (0, n_pad - n)))          # zero padding -> finite math pre-mask
        return a.reshape(4, rows_pad, _LANES)

    pred = pack(pred_n4)
    tgt = pack(tgt_n4)
    n_elems = rows_pad * _LANES

    box_spec = pl.BlockSpec((4, tile_rows, _LANES),
                            lambda c, i, n_s: (0, c * steps_per_partial + i, 0))

    out = pl.pallas_call(
        kernel,
        out_shape=jax.ShapeDtypeStruct((num_partials, _ACC_ROWS, _LANES), jnp.float32),
        grid_spec=pltpu.PrefetchScalarGridSpec(
            num_scalar_prefetch=1,
            grid=(num_partials, steps_per_partial),
            in_specs=[box_spec, box_spec],
            out_specs=pl.BlockSpec((1, _ACC_ROWS, _LANES), lambda c, i, n_s: (c, 0, 0)),
        ),
        compiler_params=pltpu.CompilerParams(
            dimension_semantics=("parallel", "arbitrary"),   # partials x accumulated reduction
            vmem_limit_bytes=32 * 1024 * 1024,               # usage ~8.5 MiB at tile_rows=1024
        ),
        cost_estimate=pl.CostEstimate(
            flops=flops_per_elem * n_elems,
            transcendentals=transcendentals_per_elem * n_elems,
            bytes_accessed=8 * 4 * n_elems + num_partials * _ACC_ROWS * _LANES * 4,
        ),
    )(n_arr, pred, tgt)

    # Tiny [num_partials, 8, 128] final reduction in XLA.
    return jnp.sum(out)


def _box_loss(kernel, pred_n4, tgt_n4, *, flops_per_elem, transcendentals_per_elem,
              max_tile_rows=_MAX_TILE_ROWS):
    n = pred_n4.shape[0]
    tile_rows, num_partials, steps_per_partial, rows_pad = _plan(n, max_tile_rows)
    n_arr = jnp.array([n], jnp.int32)
    return _box_loss_sum(pred_n4, tgt_n4, n_arr, kernel=kernel, tile_rows=tile_rows,
                         num_partials=num_partials, steps_per_partial=steps_per_partial,
                         rows_pad=rows_pad, flops_per_elem=flops_per_elem,
                         transcendentals_per_elem=transcendentals_per_elem)


# ----------------------------------------------------------------------------
# BoxLoss module (forward-pass equivalent)
# ----------------------------------------------------------------------------
class BoxLoss:
    """JAX/Pallas equivalent of the PyTorch BoxLoss module's forward pass."""

    def __init__(self, box_loss_type, box_loss_cfg=None):
        self.box_loss_type = box_loss_type
        self.box_loss_cfg = box_loss_cfg  # underlying loss fixed in-script (GIoU / L1)

    def __call__(self, box_preds, box_targets, pred_boxes, tgt_boxes,
                 max_tile_rows=_MAX_TILE_ROWS):
        if self.box_loss_type in ('boxes', 'mmdet_boxes'):
            # Boxes structures are represented here directly as xyxy arrays [num_preds, 4].
            # TODO(synk): Boxes.to_format('xyxy') conversion for other source formats is not
            # replicated; inputs are assumed already in xyxy.
            return _box_loss(_giou_sum_kernel, pred_boxes, tgt_boxes,
                             flops_per_elem=35, transcendentals_per_elem=2,
                             max_tile_rows=max_tile_rows)
        elif self.box_loss_type == 'regression':
            return _box_loss(_l1_sum_kernel, box_preds, box_targets,
                             flops_per_elem=12, transcendentals_per_elem=0,
                             max_tile_rows=max_tile_rows)
        else:
            raise ValueError(
                f"Invalid bounding box loss type (got '{self.box_loss_type}') in BoxLoss module."
            )


# ----------------------------------------------------------------------------
# Pure-JAX references for sanity checking
# ----------------------------------------------------------------------------
def _giou_sum_ref(pred, tgt):
    px1, py1, px2, py2 = [pred[:, i] for i in range(4)]
    tx1, ty1, tx2, ty2 = [tgt[:, i] for i in range(4)]
    pa = (px2 - px1) * (py2 - py1)
    ta = (tx2 - tx1) * (ty2 - ty1)
    iw = jnp.maximum(jnp.minimum(px2, tx2) - jnp.maximum(px1, tx1), 0.0)
    ih = jnp.maximum(jnp.minimum(py2, ty2) - jnp.maximum(py1, ty1), 0.0)
    inter = iw * ih
    union = pa + ta - inter
    iou = inter / (union + _EPS)
    ew = jnp.maximum(px2, tx2) - jnp.minimum(px1, tx1)
    eh = jnp.maximum(py2, ty2) - jnp.minimum(py1, ty1)
    ea = ew * eh
    giou = iou - (ea - union) / (ea + _EPS)
    return jnp.sum(1.0 - giou)


def _l1_sum_ref(pred, tgt):
    return jnp.sum(jnp.abs(pred - tgt))


# ----------------------------------------------------------------------------
# Main
# ----------------------------------------------------------------------------
if __name__ == "__main__":
    key = jax.random.PRNGKey(0)
    k1, k2, k3, k4 = jax.random.split(key, 4)

    num_preds = 8

    # Raw regression predictions/targets [num_preds, 4].
    box_preds = jax.random.normal(k1, (num_preds, 4), jnp.float32)
    box_targets = jax.random.normal(k2, (num_preds, 4), jnp.float32)

    # Valid xyxy boxes [num_preds, 4] with x2 > x1, y2 > y1.
    def make_xyxy(k, n):
        xy = jax.random.uniform(k, (n, 2), jnp.float32, 0.0, 10.0)
        wh = jax.random.uniform(jax.random.fold_in(k, 1), (n, 2), jnp.float32, 0.5, 5.0)
        return jnp.concatenate([xy, xy + wh], axis=1)

    pred_boxes = make_xyxy(k3, num_preds)
    tgt_boxes = make_xyxy(k4, num_preds)

    # 'boxes' branch -> GIoU loss kernel
    giou_module = BoxLoss('boxes', box_loss_cfg={'type': 'GIoULoss', 'reduction': 'sum'})
    giou_loss = jax.block_until_ready(giou_module(box_preds, box_targets, pred_boxes, tgt_boxes))

    # 'mmdet_boxes' branch -> same GIoU kernel on xyxy boxes
    # TODO(synk): mmdet's GIoULoss uses eps=1e-6 and loss_weight/avg_factor semantics; not replicated.
    mmdet_module = BoxLoss('mmdet_boxes', box_loss_cfg={'type': 'mmdet.GIoULoss', 'reduction': 'sum'})
    mmdet_loss = jax.block_until_ready(mmdet_module(box_preds, box_targets, pred_boxes, tgt_boxes))

    # 'regression' branch -> L1 loss kernel
    reg_module = BoxLoss('regression', box_loss_cfg={'type': 'L1Loss', 'reduction': 'sum'})
    reg_loss = jax.block_until_ready(reg_module(box_preds, box_targets, pred_boxes, tgt_boxes))

    # Exact f32 division in-kernel -> tight tolerances.
    assert jnp.allclose(giou_loss, _giou_sum_ref(pred_boxes, tgt_boxes), rtol=1e-5, atol=1e-5)
    assert jnp.allclose(mmdet_loss, giou_loss, rtol=1e-6, atol=1e-6)
    assert jnp.allclose(reg_loss, _l1_sum_ref(box_preds, box_targets), rtol=1e-5, atol=1e-5)

    # Exercise the multi-block / dual-partial / in-kernel-mask path with a modest size
    # (small max_tile_rows override keeps the test cheap while covering grid=(2, steps)).
    n_big = 4000
    kb1, kb2, kb3, kb4 = jax.random.split(jax.random.PRNGKey(1), 4)
    big_pred_boxes = make_xyxy(kb1, n_big)
    big_tgt_boxes = make_xyxy(kb2, n_big)
    big_preds = jax.random.normal(kb3, (n_big, 4), jnp.float32)
    big_targets = jax.random.normal(kb4, (n_big, 4), jnp.float32)

    big_giou = jax.block_until_ready(
        giou_module(big_preds, big_targets, big_pred_boxes, big_tgt_boxes, max_tile_rows=8))
    big_l1 = jax.block_until_ready(
        reg_module(big_preds, big_targets, big_pred_boxes, big_tgt_boxes, max_tile_rows=8))

    assert jnp.allclose(big_giou, _giou_sum_ref(big_pred_boxes, big_tgt_boxes), rtol=1e-4, atol=1e-3)
    assert jnp.allclose(big_l1, _l1_sum_ref(big_preds, big_targets), rtol=1e-4, atol=1e-3)

    print("KERNEL_OK")
</pallas_src>

<mosaic_0001>
module attributes {stable_mosaic.version = 11 : i64} {
  func.func @_giou_sum_kernel(%arg0: i32, %arg1: i32, %arg2: memref<1xi32, #tpu.memory_space<smem>>, %arg3: memref<4x8x128xf32, #tpu.memory_space<vmem>>, %arg4: memref<4x8x128xf32, #tpu.memory_space<vmem>>, %arg5: memref<1x8x128xf32, #tpu.memory_space<vmem>>) attributes {dimension_semantics = [#tpu.dimension_semantics<parallel>, #tpu.dimension_semantics<arbitrary>], iteration_bounds = array<i64: 1, 1>, scalar_prefetch = 1 : i64, scratch_operands = 0 : i64, tpu.core_type = #tpu.core_type<tc>, window_params = [{transform_indices = @transform_0, window_bounds = array<i64: 4, 8, 128>}, {transform_indices = @transform_1, window_bounds = array<i64: 4, 8, 128>}, {transform_indices = @transform_2, window_bounds = array<i64: 1, 8, 128>}]} {
    %c0_i32 = arith.constant 0 : i32
    %0 = arith.cmpi eq, %arg1, %c0_i32 : i32
    %1 = arith.extui %0 : i1 to i32
    %c0_i32_0 = arith.constant 0 : i32
    %2 = arith.cmpi ne, %1, %c0_i32_0 : i32
    scf.if %2 {
      %cst_34 = arith.constant 0.000000e+00 : f32
      %76 = vector.broadcast %cst_34 : f32 to vector<1x8x128xf32>
      %c0_35 = arith.constant 0 : index
      %c0_36 = arith.constant 0 : index
      %c0_37 = arith.constant 0 : index
      %77 = vector.load %arg5[%c0_35, %c0_36, %c0_37] : memref<1x8x128xf32, #tpu.memory_space<vmem>>, vector<1x8x128xf32>
      tpu.vector_store %arg5[%c0_35, %c0_36, %c0_37], %76 {strides = array<i32>} : memref<1x8x128xf32, #tpu.memory_space<vmem>>, vector<1x8x128xf32>,
    } else {
    }
    %c0 = arith.constant 0 : index
    %c0_1 = arith.constant 0 : index
    %c0_2 = arith.constant 0 : index
    %3 = vector.load %arg3[%c0, %c0_1, %c0_2] : memref<4x8x128xf32, #tpu.memory_space<vmem>>, vector<1x8x128xf32>
    %4 = vector.shape_cast %3 : vector<1x8x128xf32> to vector<8x128xf32>
    %c1 = arith.constant 1 : index
    %c0_3 = arith.constant 0 : index
    %c0_4 = arith.constant 0 : index
    %5 = vector.load %arg3[%c1, %c0_3, %c0_4] : memref<4x8x128xf32, #tpu.memory_space<vmem>>, vector<1x8x128xf32>
    %6 = vector.shape_cast %5 : vector<1x8x128xf32> to vector<8x128xf32>
    %c2 = arith.constant 2 : index
    %c0_5 = arith.constant 0 : index
    %c0_6 = arith.constant 0 : index
    %7 = vector.load %arg3[%c2, %c0_5, %c0_6] : memref<4x8x128xf32, #tpu.memory_space<vmem>>, vector<1x8x128xf32>
    %8 = vector.shape_cast %7 : vector<1x8x128xf32> to vector<8x128xf32>
    %c3 = arith.constant 3 : index
    %c0_7 = arith.constant 0 : index
    %c0_8 = arith.constant 0 : index
    %9 = vector.load %arg3[%c3, %c0_7, %c0_8] : memref<4x8x128xf32, #tpu.memory_space<vmem>>, vector<1x8x128xf32>
    %10 = vector.shape_cast %9 : vector<1x8x128xf32> to vector<8x128xf32>
    %c0_9 = arith.constant 0 : index
    %c0_10 = arith.constant 0 : index
    %c0_11 = arith.constant 0 : index
    %11 = vector.load %arg4[%c0_9, %c0_10, %c0_11] : memref<4x8x128xf32, #tpu.memory_space<vmem>>, vector<1x8x128xf32>
    %12 = vector.shape_cast %11 : vector<1x8x128xf32> to vector<8x128xf32>
    %c1_12 = arith.constant 1 : index
    %c0_13 = arith.constant 0 : index
    %c0_14 = arith.constant 0 : index
    %13 = vector.load %arg4[%c1_12, %c0_13, %c0_14] : memref<4x8x128xf32, #tpu.memory_space<vmem>>, vector<1x8x128xf32>
    %14 = vector.shape_cast %13 : vector<1x8x128xf32> to vector<8x128xf32>
    %c2_15 = arith.constant 2 : index
    %c0_16 = arith.constant 0 : index
    %c0_17 = arith.constant 0 : index
    %15 = vector.load %arg4[%c2_15, %c0_16, %c0_17] : memref<4x8x128xf32, #tpu.memory_space<vmem>>, vector<1x8x128xf32>
    %16 = vector.shape_cast %15 : vector<1x8x128xf32> to vector<8x128xf32>
    %c3_18 = arith.constant 3 : index
    %c0_19 = arith.constant 0 : index
    %c0_20 = arith.constant 0 : index
    %17 = vector.load %arg4[%c3_18, %c0_19, %c0_20] : memref<4x8x128xf32, #tpu.memory_space<vmem>>, vector<1x8x128xf32>
    %18 = vector.shape_cast %17 : vector<1x8x128xf32> to vector<8x128xf32>
    %19 = arith.subf %8, %4 : vector<8x128xf32>
    %20 = arith.subf %10, %6 : vector<8x128xf32>
    %21 = arith.mulf %19, %20 : vector<8x128xf32>
    %22 = arith.subf %16, %12 : vector<8x128xf32>
    %23 = arith.subf %18, %14 : vector<8x128xf32>
    %24 = arith.mulf %22, %23 : vector<8x128xf32>
    %25 = arith.minimumf %8, %16 : vector<8x128xf32>
    %26 = arith.maximumf %4, %12 : vector<8x128xf32>
    %27 = arith.subf %25, %26 : vector<8x128xf32>
    %cst = arith.constant 0.000000e+00 : f32
    %28 = vector.broadcast %cst : f32 to vector<8x128xf32>
    %29 = arith.maximumf %27, %28 : vector<8x128xf32>
    %30 = arith.minimumf %10, %18 : vector<8x128xf32>
    %31 = arith.maximumf %6, %14 : vector<8x128xf32>
    %32 = arith.subf %30, %31 : vector<8x128xf32>
    %cst_21 = arith.constant 0.000000e+00 : f32
    %33 = vector.broadcast %cst_21 : f32 to vector<8x128xf32>
    %34 = arith.maximumf %32, %33 : vector<8x128xf32>
    %35 = arith.mulf %29, %34 : vector<8x128xf32>
    %36 = arith.addf %21, %24 : vector<8x128xf32>
    %37 = arith.subf %36, %35 : vector<8x128xf32>
    %cst_22 = arith.constant 1.000000e-07 : f32
    %38 = vector.broadcast %cst_22 : f32 to vector<8x128xf32>
    %39 = arith.addf %37, %38 : vector<8x128xf32>
    %40 = arith.divf %35, %39 : vector<8x128xf32>
    %41 = arith.maximumf %8, %16 : vector<8x128xf32>
    %42 = arith.minimumf %4, %12 : vector<8x128xf32>
    %43 = arith.subf %41, %42 : vector<8x128xf32>
    %44 = arith.maximumf %10, %18 : vector<8x128xf32>
    %45 = arith.minimumf %6, %14 : vector<8x128xf32>
    %46 = arith.subf %44, %45 : vector<8x128xf32>
    %47 = arith.mulf %43, %46 : vector<8x128xf32>
    %48 = arith.subf %47, %37 : vector<8x128xf32>
    %cst_23 = arith.constant 1.000000e-07 : f32
    %49 = vector.broadcast %cst_23 : f32 to vector<8x128xf32>
    %50 = arith.addf %47, %49 : vector<8x128xf32>
    %51 = arith.divf %48, %50 : vector<8x128xf32>
    %52 = arith.subf %40, %51 : vector<8x128xf32>
    %c1_i32 = arith.constant 1 : i32
    %53 = arith.muli %arg0, %c1_i32 : i32
    %54 = arith.addi %53, %arg1 : i32
    %c8_i32 = arith.constant 8 : i32
    %55 = arith.muli %54, %c8_i32 : i32
    %56 = tpu.iota {dimensions = array<i32: 0>} : vector<8x128xi32>
    %57 = tpu.iota {dimensions = array<i32: 1>} : vector<8x128xi32>
    %58 = vector.broadcast %55 : i32 to vector<8x128xi32>
    %59 = arith.addi %58, %56 : vector<8x128xi32>
    %c128_i32 = arith.constant 128 : i32
    %60 = vector.broadcast %c128_i32 : i32 to vector<8x128xi32>
    %61 = arith.muli %59, %60 : vector<8x128xi32>
    %62 = arith.addi %61, %57 : vector<8x128xi32>
    %c0_24 = arith.constant 0 : index
    %63 = memref.load %arg2[%c0_24] : memref<1xi32, #tpu.memory_space<smem>>
    %64 = vector.broadcast %63 : i32 to vector<8x128xi32>
    %65 = arith.cmpi slt, %62, %64 : vector<8x128xi32>
    %cst_25 = arith.constant 1.000000e+00 : f32
    %66 = vector.broadcast %cst_25 : f32 to vector<8x128xf32>
    %67 = arith.subf %66, %52 : vector<8x128xf32>
    %cst_26 = arith.constant 0.000000e+00 : f32
    %68 = vector.broadcast %cst_26 : f32 to vector<8x128xf32>
    %69 = arith.select %65, %67, %68 : vector<8x128xi1>, vector<8x128xf32>
    %70 = vector.shape_cast %69 : vector<8x128xf32> to vector<1x8x128xf32>
    %cst_27 = arith.constant dense<0.000000e+00> : vector<8x128xf32>
    %71 = vector.multi_reduction <add>, %70, %cst_27 [0] : vector<1x8x128xf32> to vector<8x128xf32>
    %c0_28 = arith.constant 0 : index
    %c0_29 = arith.constant 0 : index
    %c0_30 = arith.constant 0 : index
    %72 = vector.load %arg5[%c0_28, %c0_29, %c0_30] : memref<1x8x128xf32, #tpu.memory_space<vmem>>, vector<1x8x128xf32>
    %73 = vector.shape_cast %71 : vector<8x128xf32> to vector<1x8x128xf32>
    %74 = arith.addf %72, %73 : vector<1x8x128xf32>
    %c0_31 = arith.constant 0 : index
    %c0_32 = arith.constant 0 : index
    %c0_33 = arith.constant 0 : index
    %75 = vector.load %arg5[%c0_31, %c0_32, %c0_33] : memref<1x8x128xf32, #tpu.memory_space<vmem>>, vector<1x8x128xf32>
    tpu.vector_store %arg5[%c0_31, %c0_32, %c0_33], %74 {strides = array<i32>} : memref<1x8x128xf32, #tpu.memory_space<vmem>>, vector<1x8x128xf32>,
    return
  }
  func.func @transform_0(%arg0: i32, %arg1: i32, %arg2: memref<1xi32, #tpu.memory_space<smem>>) -> (i32, i32, i32) {
    %c1_i32 = arith.constant 1 : i32
    %0 = arith.muli %arg0, %c1_i32 : i32
    %1 = arith.addi %0, %arg1 : i32
    %c0_i32 = arith.constant 0 : i32
    %c0_i32_0 = arith.constant 0 : i32
    %c0_i32_1 = arith.constant 0 : i32
    return %c0_i32, %1, %c0_i32_0 : i32, i32, i32
  }
  func.func @transform_1(%arg0: i32, %arg1: i32, %arg2: memref<1xi32, #tpu.memory_space<smem>>) -> (i32, i32, i32) {
    %c1_i32 = arith.constant 1 : i32
    %0 = arith.muli %arg0, %c1_i32 : i32
    %1 = arith.addi %0, %arg1 : i32
    %c0_i32 = arith.constant 0 : i32
    %c0_i32_0 = arith.constant 0 : i32
    %c0_i32_1 = arith.constant 0 : i32
    return %c0_i32, %1, %c0_i32_0 : i32, i32, i32
  }
  func.func @transform_2(%arg0: i32, %arg1: i32, %arg2: memref<1xi32, #tpu.memory_space<smem>>) -> (i32, i32, i32) {
    %c0_i32 = arith.constant 0 : i32
    %c0_i32_0 = arith.constant 0 : i32
    %c0_i32_1 = arith.constant 0 : i32
    return %arg0, %c0_i32, %c0_i32_0 : i32, i32, i32
  }
}

</mosaic_0001>

<llo_original>
// kernel: _box_loss_sum.1
$region0: #{_box_loss_sum.1}
  #allocation0 [shape = 'u32[]', space=smem, size = 0x4, offset = 0x4, fixed_abs, tag = 'smem constant byte address 0x4 - core index']
  #allocation1 [shape = 'u32[144,128]{1,0:T(1,128)}', space=vmem, size = 0x12000, scoped, tag = 'internal scratch']
  #allocation2 [shape = 's32[1]{0}', space=sflag, size = 0x4, scoped, tag = 'scoped memory for _box_loss_sum.1']
  #allocation3 [shape = 's32[1]{0:T(128)S(6)}', space=smem, size = 0x200, scoped, tag = 'prefetched SMEM operand 0']
  %s0 = inlined_call_operand.<no memory space> [shape: s32[1], index: 0, kind: input, shape index: {}]
  %s1 = inlined_call_operand.vmem [shape: f32[4,8,128], index: 1, kind: input, shape index: {}]
  %s2 = inlined_call_operand.vmem [shape: f32[4,8,128], index: 2, kind: input, shape index: {}]
  %s3 = inlined_call_operand.vmem [shape: f32[1,8,128], index: 3, kind: output, shape index: {}]
  %s4 = sld [smem:[#allocation0]]
  $region22: #{_box_loss_sum.1} parent=0
    _
  %s6 = ssub.s32 1, %s4
  %s7 = scalar_select 0, %s6, %s4
  %8 = sst [smem:[#allocation3]] %s0
  // Predicated region
  $region2: #{_box_loss_sum.1} parent=0 // pred_check
    _
  $region3: #{_box_loss_sum.1} parent=0 // pred_check_branch
    %10 = sbr.rel (0) target = $region5
  $region4: #{_box_loss_sum.1} parent=0 // pred_region
    %s11 = sadd.s32 0, 0
    %p12 = scmp.lt.s32.totalorder %s11, 0
    %s13 = scalar_select %p12, %s11, 0
    %s14 = smul.addr %s13, 8
    %s15 = scalar_lea.vmem %s1, %s14
    %s16 = sadd.s32 0, 0
  $region5: #{_box_loss_sum.1} parent=0 // pred_fallthru
    _
  // Predicated region
  $region6: #{_box_loss_sum.1} parent=0 // pred_check
    _
  $region7: #{_box_loss_sum.1} parent=0 // pred_check_branch
    %18 = sbr.rel (0) target = $region9
  $region8: #{_box_loss_sum.1} parent=0 // pred_region
    %s19 = sadd.s32 0, 0
    %p20 = scmp.lt.s32.totalorder %s19, 0
    %s21 = scalar_select %p20, %s19, 0
    %s22 = smul.addr %s21, 8
    %s23 = scalar_lea.vmem %s2, %s22
    %s24 = sadd.s32 0, 0
  $region9: #{_box_loss_sum.1} parent=0 // pred_fallthru
    _
  %s25 = sadd.s32 0, 0
  %p26 = scmp.lt.s32.totalorder %s25, 0
  %s27 = scalar_select %p26, %s25, 0
  %s28 = smul.addr %s27, 8
  %s29 = scalar_lea.vmem %s1, %s28
  %s30 = sadd.s32 0, 0
  %p31 = scmp.lt.s32.totalorder %s30, 0
  %s32 = scalar_select %p31, %s30, 0
  %s33 = smul.addr %s32, 8
  %s34 = scalar_lea.vmem %s2, %s33
  %s35 = sadd.s32 0, 0
  %p36 = scmp.lt.s32.totalorder %s35, 0
  %s37 = scalar_select %p36, %s35, 0
  %s38 = smul.addr %s37, 8
  %s39 = scalar_lea.vmem %s1, %s38
  %s40 = sadd.s32 0, 0
  %s41 = sadd.s32 0, 0
  %p42 = scmp.lt.s32.totalorder %s41, 0
  %s43 = scalar_select %p42, %s41, 0
  %s44 = smul.addr %s43, 8
  %s45 = scalar_lea.vmem %s2, %s44
  %s46 = sadd.s32 0, 0
  %p47 = scmp.eq.s32.totalorder 0, 0
  // Predicated region
  $region10: #{_box_loss_sum.1} parent=0 // pred_check
    %p48 = pneg %p47
  $region11: #{_box_loss_sum.1} parent=0 // pred_check_branch
    %50 = sbr.rel (%p48) target = $region13
  $region12: #{_box_loss_sum.1} parent=0 // pred_region
    %51 = vst [vmem:[%s3] sm:$0xff] 0.0
  $region13: #{_box_loss_sum.1} parent=0 // pred_fallthru
    _
  %v52 = vld [vmem:[%s39] sm:$0xff]
  %s53 = scalar_lea.vmem %s39, 8
  %v54 = vld [vmem:[%s53] sm:$0xff]
  %s55 = scalar_lea.vmem %s39, 16
  %v56 = vld [vmem:[%s55] sm:$0xff]
  %s57 = scalar_lea.vmem %s39, 24
  %v58 = vld [vmem:[%s57] sm:$0xff]
  %v59 = vld [vmem:[%s45] sm:$0xff]
  %s60 = scalar_lea.vmem %s45, 8
  %v61 = vld [vmem:[%s60] sm:$0xff]
  %s62 = scalar_lea.vmem %s45, 16
  %v63 = vld [vmem:[%s62] sm:$0xff]
  %s64 = scalar_lea.vmem %s45, 24
  %v65 = vld [vmem:[%s64] sm:$0xff]
  %v66 = vsub.f32 %v56, %v52
  %v67 = vsub.f32 %v58, %v54
  %v68 = vmul.f32 %v66, %v67
  %v69 = vsub.f32 %v63, %v59
  %v70 = vsub.f32 %v65, %v61
  %v71 = vmul.f32 %v69, %v70
  %v72 = vmin.f32 %v56, %v63
  %v73 = vmax.f32 %v52, %v59
  %v74 = vsub.f32 %v72, %v73
  %v75 = vmax.f32 %v74, 0.0
  %v76 = vmin.f32 %v58, %v65
  %v77 = vmax.f32 %v54, %v61
  %v78 = vsub.f32 %v76, %v77
  %v79 = vmax.f32 %v78, 0.0
  %v80 = vmul.f32 %v75, %v79
  %v81 = vadd.f32 %v68, %v71
  %v82 = vsub.f32 %v81, %v80
  %v83 = vadd.f32 %v82, 1e-07
  %v84 = vrcp.pop %v83
  %v85 = vmul.f32 %v80, %v84
  %v86 = vmax.f32 %v56, %v63
  %v87 = vmin.f32 %v52, %v59
  %v88 = vsub.f32 %v86, %v87
  %v89 = vmax.f32 %v58, %v65
  %v90 = vmin.f32 %v54, %v61
  %v91 = vsub.f32 %v89, %v90
  %v92 = vmul.f32 %v88, %v91
  %v93 = vsub.f32 %v92, %v82
  %v94 = vadd.f32 %v92, 1e-07
  %v95 = vrcp.pop %v94
  %v96 = vmul.f32 %v93, %v95
  %v97 = vsub.f32 %v85, %v96
  %s98 = sadd.s32 0, 0
  %s99 = smul.u32 %s98, 8
  %v100 = vlaneseq
  %v101 = vshrl.u32 %v100, 7
  %v102 = vlaneseq
  %v103 = vand.u32 %v102, 127
  %v104 = vstv %s99
  %v105 = vadd.s32 %v104, %v101
  %v106 = vmul.u32 %v105, 128
  %v107 = vadd.s32 %v106, %v103
  %s108 = sld [smem:[#allocation3]]
  %v109 = vstv %s108
  %vm110 = vcmp.lt.s32.totalorder %v107, %v109
  %v111 = vsub.f32 1.0, %v97
  %v112 = vsel %vm110, %v111, 0.0
  %v113 = vadd.f32 %v112, 0.0
  %v114 = vld [vmem:[%s3] sm:$0xff]
  %v115 = vadd.f32 %v114, %v113
  %116 = vst [vmem:[%s3] sm:$0xff] %v115
  // Predicated region
  $region14: #{_box_loss_sum.1} parent=0 // pred_check
    _
  $region15: #{_box_loss_sum.1} parent=0 // pred_check_branch
    %118 = sbr.rel (0) target = $region17
  $region16: #{_box_loss_sum.1} parent=0 // pred_region
    _
  $region17: #{_box_loss_sum.1} parent=0 // pred_fallthru
    _
  // Predicated region
  $region18: #{_box_loss_sum.1} parent=0 // pred_check
    _
  $region19: #{_box_loss_sum.1} parent=0 // pred_check_branch
    %120 = sbr.rel (0) target = $region21
  $region20: #{_box_loss_sum.1} parent=0 // pred_region
    _
  $region21: #{_box_loss_sum.1} parent=0 // pred_fallthru
    _

</llo_original>
